<compile_context>
chip_gen: v7x
topology: tpu7x:2x2x1
jax: 0.10.0
libtpu: 0.0.40
codegen_flags: <defaults>
</compile_context>

<pallas_src>
import jax
import jax.numpy as jnp
from jax.experimental import pallas as pl
from jax.experimental.pallas import tpu as pltpu


def _round_up(x: int, m: int) -> int:
    return (x + m - 1) // m * m


def _residual_mlp_kernel(x_mm_ref, w_ref, b_ref, x_res_ref, o_ref, acc_ref):
    """One (i, j, k) grid step of  out = x + relu(x @ W + b).

    Steady state (every k): acc += x_tile @ w_tile                (MXU only)
    Epilogue (k == last)  : bias + ReLU + residual add + cast     (VPU, once/tile)
    """
    k = pl.program_id(2)

    @pl.when(k == 0)
    def _init():
        acc_ref[...] = jnp.zeros_like(acc_ref)

    acc_ref[...] += jnp.dot(
        x_mm_ref[...], w_ref[...], preferred_element_type=jnp.float32
    )

    @pl.when(k == pl.num_programs(2) - 1)
    def _epilogue():
        h = acc_ref[...] + b_ref[...].astype(jnp.float32)      # bias (broadcast)
        fx = jnp.maximum(h, 0.0)                                # ReLU
        o_ref[...] = (x_res_ref[...].astype(jnp.float32) + fx).astype(o_ref.dtype)


def residual_forward(x, w, b, *, tm=128, tn=256, tk=256):
    """out = x + relu(x @ w + b), tiled for the TPU MXU.

    x: (B, H), w: (H, H), b: (H,). Works for any B, H (pads internally to
    (8,128)-aligned tiles and slices the result back).
    """
    B, H = x.shape
    assert w.shape == (H, H) and b.shape == (H,)

    # Clamp tile sizes to the (8,128)-aligned problem size so tiny inputs do
    # not force huge pads, while large inputs get full MXU-aligned tiles.
    TM = min(tm, _round_up(B, 8))
    TN = min(tn, _round_up(H, 128))
    TK = min(tk, _round_up(H, 128))

    Bp = _round_up(B, TM)   # padded batch (M)
    Hn = _round_up(H, TN)   # padded output-feature dim (N)
    Hk = _round_up(H, TK)   # padded reduction dim (K)

    def pad2(a, rows, cols):
        pr, pc = rows - a.shape[0], cols - a.shape[1]
        return a if (pr == 0 and pc == 0) else jnp.pad(a, ((0, pr), (0, pc)))

    x_mm = pad2(x, Bp, Hk)                    # (Bp, Hk)  matmul operand
    x_res = pad2(x, Bp, Hn)                   # (Bp, Hn)  residual operand
    w_p = pad2(w, Hk, Hn)                     # (Hk, Hn)
    b_p = pad2(b.reshape(1, H), 1, Hn)        # (1, Hn)

    grid = (Bp // TM, Hn // TN, Hk // TK)

    itemsize = jnp.dtype(x.dtype).itemsize
    cost = pl.CostEstimate(
        flops=2 * B * H * H,
        transcendentals=0,
        bytes_accessed=(2 * B * H + H * H + H + B * H) * itemsize,
    )

    out_p = pl.pallas_call(
        _residual_mlp_kernel,
        out_shape=jax.ShapeDtypeStruct((Bp, Hn), x.dtype),
        grid_spec=pltpu.PrefetchScalarGridSpec(
            num_scalar_prefetch=0,
            grid=grid,
            in_specs=[
                pl.BlockSpec((TM, TK), lambda i, j, k: (i, k)),   # x, matmul tile
                pl.BlockSpec((TK, TN), lambda i, j, k: (k, j)),   # W panel
                pl.BlockSpec((1, TN), lambda i, j, k: (0, j)),    # bias (epilogue)
                pl.BlockSpec((TM, TN), lambda i, j, k: (i, j)),   # x, residual tile
            ],
            out_specs=pl.BlockSpec((TM, TN), lambda i, j, k: (i, j)),
            scratch_shapes=[pltpu.VMEM((TM, TN), jnp.float32)],   # f32 accumulator
        ),
        compiler_params=pltpu.CompilerParams(
            dimension_semantics=("parallel", "parallel", "arbitrary"),
            vmem_limit_bytes=32 * 1024 * 1024,  # safe on v5e/v6e/v7x; tiles ~2 MiB
        ),
        cost_estimate=cost,
    )(x_mm, w_p, b_p, x_res)

    return out_p[:B, :H] if (Bp, Hn) != (B, H) else out_p


def residual_reference(x, w, b):
    return x + jnp.maximum(x @ w + b, 0.0)


if __name__ == "__main__":
    key = jax.random.PRNGKey(0)
    kx, kw, kb = jax.random.split(key, 3)

    # Small shapes consistent with the module (single padded tile, grid 1x1x1).
    batch, hidden = 8, 32
    x = jax.random.normal(kx, (batch, hidden), dtype=jnp.float32)
    w = jax.random.normal(kw, (hidden, hidden), dtype=jnp.float32) * (1.0 / hidden ** 0.5)
    b = jax.random.normal(kb, (hidden,), dtype=jnp.float32) * 0.01

    out = jax.block_until_ready(residual_forward(x, w, b))
    ref = residual_reference(x, w, b)
    assert out.shape == (batch, hidden) and out.dtype == x.dtype
    assert jnp.allclose(out, ref, atol=1e-5, rtol=1e-5), "f32 small-shape mismatch"

    # Multi-tile path: exercises the k-reduction accumulator + epilogue
    # (grid = (2, 2, 2) with the default 128/256/256 tiles).
    B2, H2 = 256, 512
    k2x, k2w, k2b = jax.random.split(jax.random.PRNGKey(1), 3)
    x2 = jax.random.normal(k2x, (B2, H2), dtype=jnp.float32)
    w2 = jax.random.normal(k2w, (H2, H2), dtype=jnp.float32) * (1.0 / H2 ** 0.5)
    b2 = jax.random.normal(k2b, (H2,), dtype=jnp.float32) * 0.01
    out2 = jax.block_until_ready(residual_forward(x2, w2, b2))
    ref2 = residual_reference(x2, w2, b2)
    assert jnp.allclose(out2, ref2, atol=2e-3, rtol=2e-3), "f32 tiled mismatch"

    # bf16 fast path (MXU peak dtype on v5e/v6e/v7x); f32 accumulation inside.
    xb, wb, bb = (a.astype(jnp.bfloat16) for a in (x, w, b))
    out_bf16 = jax.block_until_ready(residual_forward(xb, wb, bb))
    assert out_bf16.dtype == jnp.bfloat16
    assert jnp.allclose(out_bf16.astype(jnp.float32), ref, atol=1e-1, rtol=5e-2), \
        "bf16 path mismatch"

    print("KERNEL_OK")
</pallas_src>

<mosaic_0001>
module attributes {stable_mosaic.version = 11 : i64} {
  func.func @_residual_mlp_kernel(%arg0: i32, %arg1: i32, %arg2: i32, %arg3: memref<8x128xf32, #tpu.memory_space<vmem>>, %arg4: memref<128x128xf32, #tpu.memory_space<vmem>>, %arg5: memref<1x128xf32, #tpu.memory_space<vmem>>, %arg6: memref<8x128xf32, #tpu.memory_space<vmem>>, %arg7: memref<8x128xf32, #tpu.memory_space<vmem>>, %arg8: memref<8x128xf32, #tpu.memory_space<vmem>>) attributes {dimension_semantics = [#tpu.dimension_semantics<parallel>, #tpu.dimension_semantics<parallel>, #tpu.dimension_semantics<arbitrary>], iteration_bounds = array<i64: 1, 1, 1>, scalar_prefetch = 0 : i64, scratch_operands = 1 : i64, tpu.core_type = #tpu.core_type<tc>, window_params = [{transform_indices = @transform_0, window_bounds = array<i64: 8, 128>}, {transform_indices = @transform_1, window_bounds = array<i64: 128, 128>}, {transform_indices = @transform_2, window_bounds = array<i64: 1, 128>}, {transform_indices = @transform_3, window_bounds = array<i64: 8, 128>}, {transform_indices = @transform_4, window_bounds = array<i64: 8, 128>}]} {
    %c0_i32 = arith.constant 0 : i32
    %0 = arith.cmpi eq, %arg2, %c0_i32 : i32
    %1 = arith.extui %0 : i1 to i32
    %c0_i32_0 = arith.constant 0 : i32
    %2 = arith.cmpi ne, %1, %c0_i32_0 : i32
    scf.if %2 {
      %cst_10 = arith.constant 0.000000e+00 : f32
      %12 = vector.broadcast %cst_10 : f32 to vector<8x128xf32>
      %c0_11 = arith.constant 0 : index
      %c0_12 = arith.constant 0 : index
      %13 = vector.load %arg8[%c0_11, %c0_12] : memref<8x128xf32, #tpu.memory_space<vmem>>, vector<8x128xf32>
      tpu.vector_store %arg8[%c0_11, %c0_12], %12 {strides = array<i32>} : memref<8x128xf32, #tpu.memory_space<vmem>>, vector<8x128xf32>,
    } else {
    }
    %c0 = arith.constant 0 : index
    %c0_1 = arith.constant 0 : index
    %3 = vector.load %arg8[%c0, %c0_1] : memref<8x128xf32, #tpu.memory_space<vmem>>, vector<8x128xf32>
    %c0_2 = arith.constant 0 : index
    %c0_3 = arith.constant 0 : index
    %4 = vector.load %arg3[%c0_2, %c0_3] : memref<8x128xf32, #tpu.memory_space<vmem>>, vector<8x128xf32>
    %c0_4 = arith.constant 0 : index
    %c0_5 = arith.constant 0 : index
    %5 = vector.load %arg4[%c0_4, %c0_5] : memref<128x128xf32, #tpu.memory_space<vmem>>, vector<128x128xf32>
    %cst = arith.constant dense<0.000000e+00> : vector<8x128xf32>
    %6 = tpu.matmul %4, %5, %cst {dimension_numbers = #tpu.dot_dimension_numbers<[1], [0], [0], [1], [0, 0, 1, 1], [], []>} : vector<8x128xf32>, vector<128x128xf32>, vector<8x128xf32> -> vector<8x128xf32>
    %7 = arith.addf %3, %6 : vector<8x128xf32>
    %c0_6 = arith.constant 0 : index
    %c0_7 = arith.constant 0 : index
    %8 = vector.load %arg8[%c0_6, %c0_7] : memref<8x128xf32, #tpu.memory_space<vmem>>, vector<8x128xf32>
    tpu.vector_store %arg8[%c0_6, %c0_7], %7 {strides = array<i32>} : memref<8x128xf32, #tpu.memory_space<vmem>>, vector<8x128xf32>,
    %c0_i32_8 = arith.constant 0 : i32
    %9 = arith.cmpi eq, %arg2, %c0_i32_8 : i32
    %10 = arith.extui %9 : i1 to i32
    %c0_i32_9 = arith.constant 0 : i32
    %11 = arith.cmpi ne, %10, %c0_i32_9 : i32
    scf.if %11 {
      %c0_10 = arith.constant 0 : index
      %c0_11 = arith.constant 0 : index
      %12 = vector.load %arg8[%c0_10, %c0_11] : memref<8x128xf32, #tpu.memory_space<vmem>>, vector<8x128xf32>
      %c0_12 = arith.constant 0 : index
      %c0_13 = arith.constant 0 : index
      %13 = vector.load %arg5[%c0_12, %c0_13] : memref<1x128xf32, #tpu.memory_space<vmem>>, vector<1x128xf32>
      %14 = vector.broadcast %13 : vector<1x128xf32> to vector<8x128xf32>
      %15 = arith.addf %12, %14 : vector<8x128xf32>
      %cst_14 = arith.constant 0.000000e+00 : f32
      %16 = vector.broadcast %cst_14 : f32 to vector<8x128xf32>
      %17 = arith.maximumf %15, %16 : vector<8x128xf32>
      %c0_15 = arith.constant 0 : index
      %c0_16 = arith.constant 0 : index
      %18 = vector.load %arg6[%c0_15, %c0_16] : memref<8x128xf32, #tpu.memory_space<vmem>>, vector<8x128xf32>
      %19 = arith.addf %18, %17 : vector<8x128xf32>
      %c0_17 = arith.constant 0 : index
      %c0_18 = arith.constant 0 : index
      %20 = vector.load %arg7[%c0_17, %c0_18] : memref<8x128xf32, #tpu.memory_space<vmem>>, vector<8x128xf32>
      tpu.vector_store %arg7[%c0_17, %c0_18], %19 {strides = array<i32>} : memref<8x128xf32, #tpu.memory_space<vmem>>, vector<8x128xf32>,
    } else {
    }
    return
  }
  func.func @transform_0(%arg0: i32, %arg1: i32, %arg2: i32) -> (i32, i32) {
    %c0_i32 = arith.constant 0 : i32
    return %arg0, %arg2 : i32, i32
  }
  func.func @transform_1(%arg0: i32, %arg1: i32, %arg2: i32) -> (i32, i32) {
    %c0_i32 = arith.constant 0 : i32
    return %arg2, %arg1 : i32, i32
  }
  func.func @transform_2(%arg0: i32, %arg1: i32, %arg2: i32) -> (i32, i32) {
    %c0_i32 = arith.constant 0 : i32
    %c0_i32_0 = arith.constant 0 : i32
    return %c0_i32, %arg1 : i32, i32
  }
  func.func @transform_3(%arg0: i32, %arg1: i32, %arg2: i32) -> (i32, i32) {
    %c0_i32 = arith.constant 0 : i32
    return %arg0, %arg1 : i32, i32
  }
  func.func @transform_4(%arg0: i32, %arg1: i32, %arg2: i32) -> (i32, i32) {
    %c0_i32 = arith.constant 0 : i32
    return %arg0, %arg1 : i32, i32
  }
}

</mosaic_0001>

<llo_original>
// kernel: tpu_custom_call.1
$region0: #{tpu_custom_call.1}
  #allocation0 [shape = 'u32[]', space=smem, size = 0x4, offset = 0x4, fixed_abs, tag = 'smem constant byte address 0x4 - core index']
  #allocation1 [shape = 'u32[144,128]{1,0:T(1,128)}', space=vmem, size = 0x12000, scoped, tag = 'internal scratch']
  #allocation2 [shape = 'f32[8,128]{1,0:T(8,128)}', space=vmem, size = 0x1000, scoped, tag = 'scratch operand']
  %s0 = inlined_call_operand.hbm [shape: f32[8,128], index: 0, kind: input, shape index: {}]
  %s1 = inlined_call_operand.hbm [shape: f32[128,128], index: 1, kind: input, shape index: {}]
  %s2 = inlined_call_operand.vmem [shape: f32[1,128], index: 2, kind: input, shape index: {}]
  %s3 = inlined_call_operand.vmem [shape: f32[8,128], index: 3, kind: input, shape index: {}]
  %s4 = inlined_call_operand.hbm [shape: f32[8,128], index: 4, kind: output, shape index: {}]
  %s5 = sld [smem:[#allocation0]]
  $region42: #{tpu_custom_call.1} parent=0
    _
  %s7 = ssub.s32 1, %s5
  %s8 = scalar_select 0, %s7, %s5
  $region1: #{tpu_custom_call.1} parent=0
    #allocation3 [shape = 'u8[4096]{0}', space=vmem, size = 0x1000, scoped, tag = 'input window, operand 0, single buffered']
    #allocation4 [shape = 's32[1]{0}', space=sflag, size = 0x4, scoped, tag = 'scoped memory for tpu_custom_call.1']
    #allocation5 [shape = 's32[1]{0}', space=sflag, size = 0x4, scoped, tag = 'scoped memory for tpu_custom_call.1']
    #allocation6 [shape = 'u8[65536]{0}', space=vmem, size = 0x10000, scoped, tag = 'input window, operand 1, single buffered']
    #allocation7 [shape = 's32[1]{0}', space=sflag, size = 0x4, scoped, tag = 'scoped memory for tpu_custom_call.1']
    #allocation8 [shape = 'u8[4096]{0}', space=vmem, size = 0x1000, scoped, tag = 'output window, operand 0, single buffered']
    %9 = vsyncpa [#allocation4], 0
    %10 = vsyncpa [#allocation7], 0
    %11 = vsyncpa [#allocation5], 0
    // Predicated region
    $region2: #{tpu_custom_call.1} parent=1 // pred_check
      _
    $region3: #{tpu_custom_call.1} parent=1 // pred_check_branch
      %13 = sbr.rel (0) target = $region5
    $region4: #{tpu_custom_call.1} parent=1 // pred_region
      %s15 = ssub.s32 128, 128
      %16 = vsyncadd [#allocation4], %s15
      %s18 = sshll.u32 [#allocation3], 4
      %s19 = int_to_ptr.vmem [resolvable:$true] %s18
      %21 = dma.hbm_to_vmem [thread:$0]  %s0, 128, %s19, [#allocation4]
    $region5: #{tpu_custom_call.1} parent=1 // pred_fallthru
      _
    // Predicated region
    $region6: #{tpu_custom_call.1} parent=1 // pred_check
      _
    $region7: #{tpu_custom_call.1} parent=1 // pred_check_branch
      %23 = sbr.rel (0) target = $region9
    $region8: #{tpu_custom_call.1} parent=1 // pred_region
      %s25 = ssub.s32 2048, 2048
      %26 = vsyncadd [#allocation7], %s25
      %s27 = sshll.u32 [#allocation6], 4
      %s28 = int_to_ptr.vmem [resolvable:$true] %s27
      %33 = dma.hbm_to_vmem [thread:$0]  %s1, 2048, %s28, [#allocation7], 128, 128, 8
    $region9: #{tpu_custom_call.1} parent=1 // pred_fallthru
      _
    // Predicated region
    $region10: #{tpu_custom_call.1} parent=1 // pred_check
      _
    $region11: #{tpu_custom_call.1} parent=1 // pred_check_branch
      %35 = sbr.rel (0) target = $region13
    $region12: #{tpu_custom_call.1} parent=1 // pred_region
      _
    $region13: #{tpu_custom_call.1} parent=1 // pred_fallthru
      _
    // Predicated region
    $region14: #{tpu_custom_call.1} parent=1 // pred_check
      _
    $region15: #{tpu_custom_call.1} parent=1 // pred_check_branch
      %37 = sbr.rel (0) target = $region17
    $region16: #{tpu_custom_call.1} parent=1 // pred_region
      _
    $region17: #{tpu_custom_call.1} parent=1 // pred_fallthru
      _
    // Predicated region
    $region18: #{tpu_custom_call.1} parent=1 // pred_check
      _
    $region19: #{tpu_custom_call.1} parent=1 // pred_check_branch
      %39 = sbr.rel (0) target = $region21
    $region20: #{tpu_custom_call.1} parent=1 // pred_region
      %40 = dma.done [#allocation4], 128
    $region21: #{tpu_custom_call.1} parent=1 // pred_fallthru
      _
    // Predicated region
    $region22: #{tpu_custom_call.1} parent=1 // pred_check
      _
    $region23: #{tpu_custom_call.1} parent=1 // pred_check_branch
      %42 = sbr.rel (0) target = $region25
    $region24: #{tpu_custom_call.1} parent=1 // pred_region
      %43 = dma.done [#allocation7], 2048
    $region25: #{tpu_custom_call.1} parent=1 // pred_fallthru
      _
    %p44 = scmp.eq.s32.totalorder 0, 0
    // Predicated region
    $region26: #{tpu_custom_call.1} parent=1 // pred_check
      %p45 = pneg %p44
    $region27: #{tpu_custom_call.1} parent=1 // pred_check_branch
      %47 = sbr.rel (%p45) target = $region29
    $region28: #{tpu_custom_call.1} parent=1 // pred_region
      %48 = vst [vmem:[#allocation2] sm:$0xff] 0.0
    $region29: #{tpu_custom_call.1} parent=1 // pred_fallthru
      _
    %v49 = vld [vmem:[#allocation2] sm:$0xff]
    %v50 = vld [vmem:[#allocation3] sm:$0xff]
    %v51 = vld [vmem:[#allocation6] sm:$0xff]
    %v52 = vld [vmem:[#allocation6 + $0x8] sm:$0xff]
    %v53 = vld [vmem:[#allocation6 + $0x10] sm:$0xff]
    %v54 = vld [vmem:[#allocation6 + $0x18] sm:$0xff]
    %v55 = vld [vmem:[#allocation6 + $0x20] sm:$0xff]
    %v56 = vld [vmem:[#allocation6 + $0x28] sm:$0xff]
    %v57 = vld [vmem:[#allocation6 + $0x30] sm:$0xff]
    %v58 = vld [vmem:[#allocation6 + $0x38] sm:$0xff]
    %v59 = vld [vmem:[#allocation6 + $0x40] sm:$0xff]
    %v60 = vld [vmem:[#allocation6 + $0x48] sm:$0xff]
    %v61 = vld [vmem:[#allocation6 + $0x50] sm:$0xff]
    %v62 = vld [vmem:[#allocation6 + $0x58] sm:$0xff]
    %v63 = vld [vmem:[#allocation6 + $0x60] sm:$0xff]
    %v64 = vld [vmem:[#allocation6 + $0x68] sm:$0xff]
    %v65 = vld [vmem:[#allocation6 + $0x70] sm:$0xff]
    %v66 = vld [vmem:[#allocation6 + $0x78] sm:$0xff]
    %67 = vmatprep.subr.mxu0 0.0
    %68 = vmatpush1.msra.mxu0 %v51
    %69 = vmatprep.subr.mxu0 0.0
    %70 = vmatpush1.msra.mxu0 %v52
    %71 = vmatprep.subr.mxu0 0.0
    %72 = vmatpush1.msra.mxu0 %v53
    %73 = vmatprep.subr.mxu0 0.0
    %74 = vmatpush1.msra.mxu0 %v54
    %75 = vmatprep.subr.mxu0 0.0
    %76 = vmatpush1.msra.mxu0 %v55
    %77 = vmatprep.subr.mxu0 0.0
    %78 = vmatpush1.msra.mxu0 %v56
    %79 = vmatprep.subr.mxu0 0.0
    %80 = vmatpush1.msra.mxu0 %v57
    %81 = vmatprep.subr.mxu0 0.0
    %82 = vmatpush1.msra.mxu0 %v58
    %83 = vmatprep.subr.mxu0 0.0
    %84 = vmatpush1.msra.mxu0 %v59
    %85 = vmatprep.subr.mxu0 0.0
    %86 = vmatpush1.msra.mxu0 %v60
    %87 = vmatprep.subr.mxu0 0.0
    %88 = vmatpush1.msra.mxu0 %v61
    %89 = vmatprep.subr.mxu0 0.0
    %90 = vmatpush1.msra.mxu0 %v62
    %91 = vmatprep.subr.mxu0 0.0
    %92 = vmatpush1.msra.mxu0 %v63
    %93 = vmatprep.subr.mxu0 0.0
    %94 = vmatpush1.msra.mxu0 %v64
    %95 = vmatprep.subr.mxu0 0.0
    %96 = vmatpush1.msra.mxu0 %v65
    %97 = vmatprep.subr.mxu0 0.0
    %98 = vmatpush1.msra.mxu0 %v66
    %99 = vmatprep.subr.mxu0 0.0
    %100 = vmatpush1.msra.mxu0 0.0
    %101 = vmatprep.subr.mxu0 0.0
    %102 = vmatpush1.msra.mxu0 0.0
    %103 = vmatprep.subr.mxu0 0.0
    %104 = vmatpush1.msra.mxu0 0.0
    %105 = vmatprep.subr.mxu0 0.0
    %106 = vmatpush1.msra.mxu0 0.0
    %107 = vmatprep.subr.mxu0 0.0
    %108 = vmatpush1.msra.mxu0 0.0
    %109 = vmatprep.subr.mxu0 0.0
    %110 = vmatpush1.msra.mxu0 0.0
    %111 = vmatprep.subr.mxu0 0.0
    %112 = vmatpush1.msra.mxu0 0.0
    %113 = vmatprep.subr.mxu0 0.0
    %114 = vmatpush1.msra.mxu0 0.0
    %115 = vmatprep.subr.mxu0 0.0
    %116 = vmatpush1.msra.mxu0 0.0
    %117 = vmatprep.subr.mxu0 0.0
    %118 = vmatpush1.msra.mxu0 0.0
    %119 = vmatprep.subr.mxu0 0.0
    %120 = vmatpush1.msra.mxu0 0.0
    %121 = vmatprep.subr.mxu0 0.0
    %122 = vmatpush1.msra.mxu0 0.0
    %123 = vmatprep.subr.mxu0 0.0
    %124 = vmatpush1.msra.mxu0 0.0
    %125 = vmatprep.subr.mxu0 0.0
    %126 = vmatpush1.msra.mxu0 0.0
    %127 = vmatprep.subr.mxu0 0.0
    %128 = vmatpush1.msra.mxu0 0.0
    %129 = vmatprep.subr.mxu0 0.0
    %130 = vmatpush1.msra.mxu0 0.0
    %131 = vmatprep.mubr.f32.mxu0 0.0
    %132 = vmatmul.mubr.f32.gmra.mrb[0].mxu0 %v50
    %v133 = vpop.f32.mrb[0].mxu0
    %v134 = vadd.f32 0.0, %v133
    %v135 = vpop.f32.mrb[0].mxu0
    %136 = vdwg.mxu0
    %v137 = vadd.f32 %v49, %v134
    %138 = vst [vmem:[#allocation2] sm:$0xff] %v137
    // Predicated region
    $region30: #{tpu_custom_call.1} parent=1 // pred_check
      %p139 = pneg %p44
    $region31: #{tpu_custom_call.1} parent=1 // pred_check_branch
      %141 = sbr.rel (%p139) target = $region33
    $region32: #{tpu_custom_call.1} parent=1 // pred_region
      %v142 = vld [vmem:[#allocation2] sm:$0xff]
      %v143 = vld [vmem:[%s2] sm:$0x1]
      %v145 = vlaneseq
      %v146 = vshrl.u32 %v145, 7
      %v147 = vsub.s32 0, %v146
      %v148 = vrot.slane %v143, %v147
      %v150 = vadd.f32 %v142, %v148
      %v151 = vmax.f32 %v150, 0.0
      %v152 = vld [vmem:[%s3] sm:$0xff]
      %v153 = vadd.f32 %v152, %v151
      %154 = vst [vmem:[#allocation8] sm:$0xff] %v153
    $region33: #{tpu_custom_call.1} parent=1 // pred_fallthru
      _
    // Predicated region
    $region34: #{tpu_custom_call.1} parent=1 // pred_check
      _
    $region35: #{tpu_custom_call.1} parent=1 // pred_check_branch
      %156 = sbr.rel (0) target = $region37
    $region36: #{tpu_custom_call.1} parent=1 // pred_region
      %s158 = ssub.s32 128, 128
      %159 = vsyncadd [#allocation5], %s158
      %s161 = sshll.u32 [#allocation8], 4
      %s162 = int_to_ptr.vmem [resolvable:$true] %s161
      %164 = dma.vmem_to_hbm [thread:$0]  %s162, 128, %s4, [#allocation5]
    $region37: #{tpu_custom_call.1} parent=1 // pred_fallthru
      _
    // Predicated region
    $region38: #{tpu_custom_call.1} parent=1 // pred_check
      _
    $region39: #{tpu_custom_call.1} parent=1 // pred_check_branch
      %166 = sbr.rel (0) target = $region41
    $region40: #{tpu_custom_call.1} parent=1 // pred_region
      %167 = dma.done [#allocation5], 128
    $region41: #{tpu_custom_call.1} parent=1 // pred_fallthru
      _
    %168 = vsyncpa [#allocation4], 1
    %169 = vsyncpa [#allocation7], 1
    %170 = vsyncpa [#allocation5], 1

</llo_original>
